<compile_context>
chip_gen: v7x
topology: tpu7x:2x2x1
jax: 0.10.0
libtpu: 0.0.40
codegen_flags: <defaults>
</compile_context>

<pallas_src>
import math
from functools import partial

import numpy as np
import jax
import jax.numpy as jnp
from jax.experimental import pallas as pl
from jax.experimental.pallas import tpu as pltpu

LANES = 128   # padded physical feature width


# -----------------------------------------------------------------------------
# Host-side greedy graph coarsening — faithful replication of MNGRAPH's while
# loop (argsort / unique / isin / edge contraction / searchsorted).  This is
# data-dependent, dynamic-shape control flow with no clean Pallas equivalent,
# so it runs in numpy on the host and only produces the cluster structure.
# TODO(synk): the O(E^2) reverse-edge dedup mirrors the reference; it is a host
# scalability hazard for large graphs, not a numerical issue.
# -----------------------------------------------------------------------------
def coarsen_graph(edge_index, num_nodes):
    ei = np.array(edge_index, dtype=np.int64, copy=True)            # (2, E)
    deg_in = np.bincount(ei[0], minlength=num_nodes).astype(np.float64)
    deg_out = np.bincount(ei[1], minlength=num_nodes).astype(np.float64)
    D = deg_in + deg_out

    select = []
    clusters = []                                   # list of (center, H array)
    visits = np.zeros(num_nodes, dtype=bool)
    others = np.argsort(-D, kind="stable")          # descending degree

    while others.size > 0:
        node = int(others[0])
        select.append(node)
        visits[node] = True
        H = np.unique(np.concatenate([ei[1][ei[0] == node],
                                      ei[0][ei[1] == node]]))
        visits[H] = True
        others = others[~visits[others]]

        # contract non-selected neighbors into `node`
        h_not_sel = H[~np.isin(H, np.array(select, dtype=np.int64))]
        mask = np.isin(ei, h_not_sel)
        ei[mask] = node
        keep = ei[0] != ei[1]                        # drop self loops
        ei = ei[:, keep]
        r = ei[::-1, :]                              # reversed edges
        if ei.shape[1] > 0:
            dup = (r[:, :, None] == ei[:, None, :]).all(axis=0).any(axis=1)
            ei = np.concatenate([ei, r[:, ~dup]], axis=1)
        clusters.append((node, H))

    sort_sel = np.sort(np.array(select, dtype=np.int64))
    new_ei = np.stack([np.searchsorted(sort_sel, ei[0]),
                       np.searchsorted(sort_sel, ei[1])], axis=0)
    return clusters, new_ei


# -----------------------------------------------------------------------------
# Tiling helpers
# -----------------------------------------------------------------------------
def _round_up(x, m):
    return ((x + m - 1) // m) * m


def _choose_tiles(M, N):
    np128 = _round_up(max(N, 1), 128)
    tn = min(512, np128)                 # reduction tile along N (lane dim of A)
    Np = _round_up(np128, tn)
    m8 = _round_up(max(M, 1), 8)
    tm = min(256, m8)                    # output tile along M (parallel axis)
    Mp = _round_up(m8, tm)
    return tm, tn, Mp, Np


# -----------------------------------------------------------------------------
# Pallas kernel: per-cluster embedding, fused concat, lane-dense output.
#   acc  = A @ X              (neighborhood mean; A rows carry 1/|H|)
#   Dv   = x[center]*W2 + B2  -> lanes [0:S)
#   Dn   = acc @ W1M + B1s    -> lanes [S:2S)   (W1M = diag(W1) composed with a
#                                                lane shift by S, precomputed)
#   out  = relu?(Dv + Dn)     one unmasked (tm, 128) store, concat fused in-reg.
# -----------------------------------------------------------------------------
def _make_mngraph_kernel(apply_relu):
    def kernel(xc_ref, xall_ref, a_ref, w1m_ref, wb_ref, o_ref, acc_ref):
        j = pl.program_id(1)

        @pl.when(j == 0)
        def _init():
            acc_ref[...] = jnp.zeros_like(acc_ref)

        acc_ref[...] += jnp.dot(a_ref[...], xall_ref[...],
                                preferred_element_type=jnp.float32)

        @pl.when(j == pl.num_programs(1) - 1)
        def _finalize():
            wb = wb_ref[...]
            w2 = wb[0:1, :]          # W2 in lanes [0:S)
            b2 = wb[1:2, :]          # B2 in lanes [0:S)
            b1s = wb[2:3, :]         # B1 pre-shifted into lanes [S:2S)
            dv = xc_ref[...] * w2 + b2
            dn = jnp.dot(acc_ref[...], w1m_ref[...],
                         preferred_element_type=jnp.float32) + b1s
            out = dv + dn            # disjoint lane support -> fused [Dv | Dn]
            if apply_relu:
                out = jnp.maximum(out, 0.0)
            o_ref[...] = out
    return kernel


def _mngraph_pallas(xc, xall, A, w1m, wb, *, apply_relu, tm, tn):
    Mp = xc.shape[0]
    Np = xall.shape[0]
    grid = (Mp // tm, Np // tn)
    # TODO(synk): for large graphs, replace the dense (M, N) adjacency by a
    # scalar-prefetched neighbor-index gather + segment mean (O(E*S) instead of
    # O(M*N*S)); dense-but-tiled is kept here for robustness at these sizes.
    return pl.pallas_call(
        _make_mngraph_kernel(apply_relu),
        out_shape=jax.ShapeDtypeStruct((Mp, LANES), jnp.float32),
        grid_spec=pltpu.PrefetchScalarGridSpec(
            num_scalar_prefetch=0,
            grid=grid,
            in_specs=[
                pl.BlockSpec((tm, LANES), lambda i, j: (i, 0)),     # x[centers]
                pl.BlockSpec((tn, LANES), lambda i, j: (j, 0)),     # all node features
                pl.BlockSpec((tm, tn), lambda i, j: (i, j)),        # row-normalized adjacency
                pl.BlockSpec((LANES, LANES), lambda i, j: (0, 0)),  # diag(W1) @ shift(S)
                pl.BlockSpec((8, LANES), lambda i, j: (0, 0)),      # stacked [W2; B2; B1s]
            ],
            out_specs=pl.BlockSpec((tm, LANES), lambda i, j: (i, 0)),
            scratch_shapes=[pltpu.VMEM((tm, LANES), jnp.float32)],
        ),
        compiler_params=pltpu.CompilerParams(
            dimension_semantics=("parallel", "arbitrary")),
    )(xc, xall, A, w1m, wb)


# -----------------------------------------------------------------------------
# Jitted per-layer device path: row-pad, center gather, kernel, vectorized
# stale-row (empty-cluster) fixup — a single XLA dispatch per layer.
# -----------------------------------------------------------------------------
@partial(jax.jit, static_argnames=("apply_relu", "tm", "tn"))
def _mngraph_device(x, A, centers, row_map, w1m, wb, *, apply_relu, tm, tn):
    Np = A.shape[1]
    n = x.shape[0]
    xp = jnp.zeros((Np, LANES), jnp.float32).at[:n, :].set(x)
    xc = jnp.take(xp, centers, axis=0)                 # (Mp, 128) center rows
    out = _mngraph_pallas(xc, xp, A, w1m, wb,
                          apply_relu=apply_relu, tm=tm, tn=tn)
    # row_map[i] == i for non-empty clusters, otherwise index of the most recent
    # non-empty cluster (the reference re-appends the previous stale M).
    return jnp.take(out, row_map, axis=0)


# -----------------------------------------------------------------------------
# MNGRAPH layer / S model (functional)
# -----------------------------------------------------------------------------
def init_mngraph_params(key, S):
    k1, k2 = jax.random.split(key)
    bound = math.sqrt(6.0 / (S + 1))            # xavier_uniform on the (1, S) view
    W1 = jax.random.uniform(k1, (S,), jnp.float32, -bound, bound)
    W2 = jax.random.uniform(k2, (S,), jnp.float32, -bound, bound)
    B1 = jnp.zeros((S,), jnp.float32)
    B2 = jnp.zeros((S,), jnp.float32)
    return (W1, W2, B1, B2)


def mngraph_forward(params, x, edge_index, apply_relu):
    """x: (N, 128) padded physical layout with logical features in lanes [0:S)."""
    W1, W2, B1, B2 = params
    S = int(W1.shape[0])
    assert 2 * S <= LANES
    N = int(x.shape[0])
    clusters, new_ei = coarsen_graph(edge_index, N)
    M = len(clusters)
    tm, tn, Mp, Np = _choose_tiles(M, N)

    A = np.zeros((Mp, Np), np.float32)          # row-normalized adjacency (padded)
    centers = np.zeros((Mp,), np.int32)
    row_map = np.arange(M, dtype=np.int32)
    last_nonempty = 0
    for i, (c, H) in enumerate(clusters):
        centers[i] = c
        if H.size > 0:
            A[i, H] = 1.0 / float(H.size)
            last_nonempty = i
        else:
            # TODO(synk): reference re-appends the previous (stale) M; undefined
            # when the very first cluster has no neighbors — we keep row 0 as-is.
            row_map[i] = last_nonempty

    # Pack parameters into the padded-lane layout used by the kernel.
    w1_np = np.asarray(W1, np.float32)
    wb = np.zeros((8, LANES), np.float32)
    wb[0, :S] = np.asarray(W2, np.float32)
    wb[1, :S] = np.asarray(B2, np.float32)
    wb[2, S:2 * S] = np.asarray(B1, np.float32)
    w1m = np.zeros((LANES, LANES), np.float32)  # scale by W1 and shift lanes by S
    w1m[np.arange(S), S + np.arange(S)] = w1_np

    out = _mngraph_device(jnp.asarray(x, jnp.float32), jnp.asarray(A),
                          jnp.asarray(centers), jnp.asarray(row_map),
                          jnp.asarray(w1m), jnp.asarray(wb),
                          apply_relu=apply_relu, tm=tm, tn=tn)
    return out, new_ei


def s_forward(params, x, edge_index):
    p1, p2, p3 = params
    x, ei = mngraph_forward(p1, x, edge_index, apply_relu=True)   # relu after L1
    x, ei = mngraph_forward(p2, x, ei, apply_relu=True)           # relu after L2
    x, ei = mngraph_forward(p3, x, ei, apply_relu=False)          # L3, no relu
    S3 = int(p3[0].shape[0])
    return x[0, :2 * S3]


# -----------------------------------------------------------------------------
# Pure-numpy reference of the same forward pass (for self-verification).
# -----------------------------------------------------------------------------
def _mngraph_ref(params, xpad, edge_index, apply_relu):
    W1, W2, B1, B2 = (np.asarray(p, np.float32) for p in params)
    S = W1.shape[0]
    clusters, new_ei = coarsen_graph(edge_index, xpad.shape[0])
    rows, last = [], None
    for c, H in clusters:
        if H.size > 0:
            row = np.zeros(LANES, np.float32)
            row[:S] = xpad[c, :S] * W2 + B2
            row[S:2 * S] = xpad[H][:, :S].mean(axis=0) * W1 + B1
            last = row
        else:
            if last is None:
                row = np.zeros(LANES, np.float32)
                row[:S] = xpad[c, :S] * W2 + B2
                row[S:2 * S] = B1
                last = row
            row = last
        rows.append(row)
    out = np.stack(rows)
    if apply_relu:
        out = np.maximum(out, 0.0)
    return out, new_ei


def s_forward_ref(params, xpad, edge_index):
    p1, p2, p3 = params
    x, ei = _mngraph_ref(p1, np.asarray(xpad, np.float32), edge_index, True)
    x, ei = _mngraph_ref(p2, x, ei, True)
    x, ei = _mngraph_ref(p3, x, ei, False)
    S3 = int(np.asarray(p3[0]).shape[0])
    return x[0, :2 * S3]


if __name__ == "__main__":
    key = jax.random.PRNGKey(0)
    kx, k1, k2, k3 = jax.random.split(key, 4)

    # TODO(synk): the reference uses layer sizes (7, 12, 24), which is
    # shape-inconsistent (each MNGRAPH outputs 2*S features but the next layer
    # multiplies by an S-vector); we keep the structure with consistent sizes
    # (7, 14, 28).
    S1, S2, S3 = 7, 14, 28
    params = (init_mngraph_params(k1, S1),
              init_mngraph_params(k2, S2),
              init_mngraph_params(k3, S3))

    # Small graph: 5 hub nodes (0..4) on a path, each hub with 2 leaf nodes.
    num_nodes = 15
    src = [0, 1, 2, 3, 0, 0, 1, 1, 2, 2, 3, 3, 4, 4]
    dst = [1, 2, 3, 4, 5, 6, 7, 8, 9, 10, 11, 12, 13, 14]
    edge_index = np.stack([np.array(src), np.array(dst)], axis=0).astype(np.int64)

    x_logical = jax.random.normal(kx, (num_nodes, S1), dtype=jnp.float32)
    # Pad the feature axis to 128 lanes once; the padded layout threads through
    # all three layers and is sliced back to logical width at the very end.
    x0 = jnp.zeros((num_nodes, LANES), jnp.float32).at[:, :S1].set(x_logical)

    out = s_forward(params, x0, edge_index)
    out = jax.block_until_ready(out)
    ref = s_forward_ref(params, np.asarray(x0), edge_index)

    assert out.shape == (2 * S3,)
    assert bool(jnp.all(jnp.isfinite(out)))
    assert np.allclose(np.asarray(out), ref, rtol=2e-3, atol=2e-3)
    print("KERNEL_OK")
</pallas_src>

<mosaic_0001>
module attributes {stable_mosaic.version = 11 : i64} {
  func.func @kernel(%arg0: i32, %arg1: i32, %arg2: memref<8x128xf32, #tpu.memory_space<vmem>>, %arg3: memref<128x128xf32, #tpu.memory_space<vmem>>, %arg4: memref<8x128xf32, #tpu.memory_space<vmem>>, %arg5: memref<128x128xf32, #tpu.memory_space<vmem>>, %arg6: memref<8x128xf32, #tpu.memory_space<vmem>>, %arg7: memref<8x128xf32, #tpu.memory_space<vmem>>, %arg8: memref<8x128xf32, #tpu.memory_space<vmem>>) attributes {dimension_semantics = [#tpu.dimension_semantics<parallel>, #tpu.dimension_semantics<arbitrary>], iteration_bounds = array<i64: 1, 1>, scalar_prefetch = 0 : i64, scratch_operands = 1 : i64, tpu.core_type = #tpu.core_type<tc>, window_params = [{transform_indices = @transform_0, window_bounds = array<i64: 8, 128>}, {transform_indices = @transform_1, window_bounds = array<i64: 128, 128>}, {transform_indices = @transform_2, window_bounds = array<i64: 8, 128>}, {pipeline_mode = #tpu.pipeline_mode<synchronous>, transform_indices = @transform_3, window_bounds = array<i64: 128, 128>}, {pipeline_mode = #tpu.pipeline_mode<synchronous>, transform_indices = @transform_4, window_bounds = array<i64: 8, 128>}, {transform_indices = @transform_5, window_bounds = array<i64: 8, 128>}]} {
    %c0_i32 = arith.constant 0 : i32
    %0 = arith.cmpi eq, %arg1, %c0_i32 : i32
    %1 = arith.extui %0 : i1 to i32
    %c0_i32_0 = arith.constant 0 : i32
    %2 = arith.cmpi ne, %1, %c0_i32_0 : i32
    scf.if %2 {
      %cst_10 = arith.constant 0.000000e+00 : f32
      %12 = vector.broadcast %cst_10 : f32 to vector<8x128xf32>
      %c0_11 = arith.constant 0 : index
      %c0_12 = arith.constant 0 : index
      %13 = vector.load %arg8[%c0_11, %c0_12] : memref<8x128xf32, #tpu.memory_space<vmem>>, vector<8x128xf32>
      tpu.vector_store %arg8[%c0_11, %c0_12], %12 {strides = array<i32>} : memref<8x128xf32, #tpu.memory_space<vmem>>, vector<8x128xf32>,
    } else {
    }
    %c0 = arith.constant 0 : index
    %c0_1 = arith.constant 0 : index
    %3 = vector.load %arg8[%c0, %c0_1] : memref<8x128xf32, #tpu.memory_space<vmem>>, vector<8x128xf32>
    %c0_2 = arith.constant 0 : index
    %c0_3 = arith.constant 0 : index
    %4 = vector.load %arg4[%c0_2, %c0_3] : memref<8x128xf32, #tpu.memory_space<vmem>>, vector<8x128xf32>
    %c0_4 = arith.constant 0 : index
    %c0_5 = arith.constant 0 : index
    %5 = vector.load %arg3[%c0_4, %c0_5] : memref<128x128xf32, #tpu.memory_space<vmem>>, vector<128x128xf32>
    %cst = arith.constant dense<0.000000e+00> : vector<8x128xf32>
    %6 = tpu.matmul %4, %5, %cst {dimension_numbers = #tpu.dot_dimension_numbers<[1], [0], [0], [1], [0, 0, 1, 1], [], []>} : vector<8x128xf32>, vector<128x128xf32>, vector<8x128xf32> -> vector<8x128xf32>
    %7 = arith.addf %3, %6 : vector<8x128xf32>
    %c0_6 = arith.constant 0 : index
    %c0_7 = arith.constant 0 : index
    %8 = vector.load %arg8[%c0_6, %c0_7] : memref<8x128xf32, #tpu.memory_space<vmem>>, vector<8x128xf32>
    tpu.vector_store %arg8[%c0_6, %c0_7], %7 {strides = array<i32>} : memref<8x128xf32, #tpu.memory_space<vmem>>, vector<8x128xf32>,
    %c0_i32_8 = arith.constant 0 : i32
    %9 = arith.cmpi eq, %arg1, %c0_i32_8 : i32
    %10 = arith.extui %9 : i1 to i32
    %c0_i32_9 = arith.constant 0 : i32
    %11 = arith.cmpi ne, %10, %c0_i32_9 : i32
    scf.if %11 {
      %c0_10 = arith.constant 0 : index
      %c0_11 = arith.constant 0 : index
      %12 = vector.load %arg6[%c0_10, %c0_11] : memref<8x128xf32, #tpu.memory_space<vmem>>, vector<8x128xf32>
      %13 = vector.extract_strided_slice %12 {offsets = [0, 0], sizes = [1, 128], strides = [1, 1]} : vector<8x128xf32> to vector<1x128xf32>
      %14 = vector.extract_strided_slice %12 {offsets = [1, 0], sizes = [1, 128], strides = [1, 1]} : vector<8x128xf32> to vector<1x128xf32>
      %15 = vector.extract_strided_slice %12 {offsets = [2, 0], sizes = [1, 128], strides = [1, 1]} : vector<8x128xf32> to vector<1x128xf32>
      %c0_12 = arith.constant 0 : index
      %c0_13 = arith.constant 0 : index
      %16 = vector.load %arg2[%c0_12, %c0_13] : memref<8x128xf32, #tpu.memory_space<vmem>>, vector<8x128xf32>
      %17 = vector.broadcast %13 : vector<1x128xf32> to vector<8x128xf32>
      %18 = arith.mulf %16, %17 : vector<8x128xf32>
      %19 = vector.broadcast %14 : vector<1x128xf32> to vector<8x128xf32>
      %20 = arith.addf %18, %19 : vector<8x128xf32>
      %c0_14 = arith.constant 0 : index
      %c0_15 = arith.constant 0 : index
      %21 = vector.load %arg8[%c0_14, %c0_15] : memref<8x128xf32, #tpu.memory_space<vmem>>, vector<8x128xf32>
      %c0_16 = arith.constant 0 : index
      %c0_17 = arith.constant 0 : index
      %22 = vector.load %arg5[%c0_16, %c0_17] : memref<128x128xf32, #tpu.memory_space<vmem>>, vector<128x128xf32>
      %cst_18 = arith.constant dense<0.000000e+00> : vector<8x128xf32>
      %23 = tpu.matmul %21, %22, %cst_18 {dimension_numbers = #tpu.dot_dimension_numbers<[1], [0], [0], [1], [0, 0, 1, 1], [], []>} : vector<8x128xf32>, vector<128x128xf32>, vector<8x128xf32> -> vector<8x128xf32>
      %24 = vector.broadcast %15 : vector<1x128xf32> to vector<8x128xf32>
      %25 = arith.addf %23, %24 : vector<8x128xf32>
      %26 = arith.addf %20, %25 : vector<8x128xf32>
      %cst_19 = arith.constant 0.000000e+00 : f32
      %27 = vector.broadcast %cst_19 : f32 to vector<8x128xf32>
      %28 = arith.maximumf %26, %27 : vector<8x128xf32>
      %c0_20 = arith.constant 0 : index
      %c0_21 = arith.constant 0 : index
      %29 = vector.load %arg7[%c0_20, %c0_21] : memref<8x128xf32, #tpu.memory_space<vmem>>, vector<8x128xf32>
      tpu.vector_store %arg7[%c0_20, %c0_21], %28 {strides = array<i32>} : memref<8x128xf32, #tpu.memory_space<vmem>>, vector<8x128xf32>,
    } else {
    }
    return
  }
  func.func @transform_0(%arg0: i32, %arg1: i32) -> (i32, i32) {
    %c0_i32 = arith.constant 0 : i32
    %c0_i32_0 = arith.constant 0 : i32
    return %arg0, %c0_i32 : i32, i32
  }
  func.func @transform_1(%arg0: i32, %arg1: i32) -> (i32, i32) {
    %c0_i32 = arith.constant 0 : i32
    %c0_i32_0 = arith.constant 0 : i32
    return %arg1, %c0_i32 : i32, i32
  }
  func.func @transform_2(%arg0: i32, %arg1: i32) -> (i32, i32) {
    %c0_i32 = arith.constant 0 : i32
    return %arg0, %arg1 : i32, i32
  }
  func.func @transform_3(%arg0: i32, %arg1: i32) -> (i32, i32) {
    %c0_i32 = arith.constant 0 : i32
    %c0_i32_0 = arith.constant 0 : i32
    %c0_i32_1 = arith.constant 0 : i32
    return %c0_i32, %c0_i32_0 : i32, i32
  }
  func.func @transform_4(%arg0: i32, %arg1: i32) -> (i32, i32) {
    %c0_i32 = arith.constant 0 : i32
    %c0_i32_0 = arith.constant 0 : i32
    %c0_i32_1 = arith.constant 0 : i32
    return %c0_i32, %c0_i32_0 : i32, i32
  }
  func.func @transform_5(%arg0: i32, %arg1: i32) -> (i32, i32) {
    %c0_i32 = arith.constant 0 : i32
    %c0_i32_0 = arith.constant 0 : i32
    return %arg0, %c0_i32 : i32, i32
  }
}

</mosaic_0001>

<llo_original>
// kernel: _mngraph_device.1
$region0: #{_mngraph_device.1}
  #allocation0 [shape = 'u32[]', space=smem, size = 0x4, offset = 0x4, fixed_abs, tag = 'smem constant byte address 0x4 - core index']
  #allocation1 [shape = 'u32[144,128]{1,0:T(1,128)}', space=vmem, size = 0x12000, scoped, tag = 'internal scratch']
  #allocation2 [shape = 'f32[8,128]{1,0:T(8,128)}', space=vmem, size = 0x1000, scoped, tag = 'scratch operand']
  %s0 = inlined_call_operand.vmem [shape: f32[8,128], index: 0, kind: input, shape index: {}]
  %s1 = inlined_call_operand.vmem [shape: f32[128,128], index: 1, kind: input, shape index: {}]
  %s2 = inlined_call_operand.vmem [shape: f32[8,128], index: 2, kind: input, shape index: {}]
  %s3 = inlined_call_operand.vmem [shape: f32[128,128], index: 3, kind: input, shape index: {}]
  %s4 = inlined_call_operand.vmem [shape: f32[8,128], index: 4, kind: input, shape index: {}]
  %s5 = inlined_call_operand.vmem [shape: f32[8,128], index: 5, kind: output, shape index: {}]
  %s6 = sld [smem:[#allocation0]]
  $region38: #{_mngraph_device.1} parent=0
    _
  %s8 = ssub.s32 1, %s6
  %s9 = scalar_select 0, %s8, %s6
  // Predicated region
  $region2: #{_mngraph_device.1} parent=0 // pred_check
    _
  $region3: #{_mngraph_device.1} parent=0 // pred_check_branch
    %11 = sbr.rel (0) target = $region5
  $region4: #{_mngraph_device.1} parent=0 // pred_region
    _
  $region5: #{_mngraph_device.1} parent=0 // pred_fallthru
    _
  // Predicated region
  $region6: #{_mngraph_device.1} parent=0 // pred_check
    _
  $region7: #{_mngraph_device.1} parent=0 // pred_check_branch
    %13 = sbr.rel (0) target = $region9
  $region8: #{_mngraph_device.1} parent=0 // pred_region
    _
  $region9: #{_mngraph_device.1} parent=0 // pred_fallthru
    _
  // Predicated region
  $region10: #{_mngraph_device.1} parent=0 // pred_check
    _
  $region11: #{_mngraph_device.1} parent=0 // pred_check_branch
    %15 = sbr.rel (0) target = $region13
  $region12: #{_mngraph_device.1} parent=0 // pred_region
    _
  $region13: #{_mngraph_device.1} parent=0 // pred_fallthru
    _
  // Predicated region
  $region14: #{_mngraph_device.1} parent=0 // pred_check
    _
  $region15: #{_mngraph_device.1} parent=0 // pred_check_branch
    %17 = sbr.rel (0) target = $region17
  $region16: #{_mngraph_device.1} parent=0 // pred_region
    _
  $region17: #{_mngraph_device.1} parent=0 // pred_fallthru
    _
  // Predicated region
  $region18: #{_mngraph_device.1} parent=0 // pred_check
    _
  $region19: #{_mngraph_device.1} parent=0 // pred_check_branch
    %19 = sbr.rel (0) target = $region21
  $region20: #{_mngraph_device.1} parent=0 // pred_region
    _
  $region21: #{_mngraph_device.1} parent=0 // pred_fallthru
    _
  %p20 = scmp.eq.s32.totalorder 0, 0
  // Predicated region
  $region22: #{_mngraph_device.1} parent=0 // pred_check
    %p21 = pneg %p20
  $region23: #{_mngraph_device.1} parent=0 // pred_check_branch
    %23 = sbr.rel (%p21) target = $region25
  $region24: #{_mngraph_device.1} parent=0 // pred_region
    %24 = vst [vmem:[#allocation2] sm:$0xff] 0.0
  $region25: #{_mngraph_device.1} parent=0 // pred_fallthru
    _
  %v25 = vld [vmem:[#allocation2] sm:$0xff]
  %v26 = vld [vmem:[%s2] sm:$0xff]
  %v27 = vld [vmem:[%s1] sm:$0xff]
  %v28 = vld [vmem:[%s1 + $0x8] sm:$0xff]
  %v29 = vld [vmem:[%s1 + $0x10] sm:$0xff]
  %v30 = vld [vmem:[%s1 + $0x18] sm:$0xff]
  %v31 = vld [vmem:[%s1 + $0x20] sm:$0xff]
  %v32 = vld [vmem:[%s1 + $0x28] sm:$0xff]
  %v33 = vld [vmem:[%s1 + $0x30] sm:$0xff]
  %v34 = vld [vmem:[%s1 + $0x38] sm:$0xff]
  %v35 = vld [vmem:[%s1 + $0x40] sm:$0xff]
  %v36 = vld [vmem:[%s1 + $0x48] sm:$0xff]
  %v37 = vld [vmem:[%s1 + $0x50] sm:$0xff]
  %v38 = vld [vmem:[%s1 + $0x58] sm:$0xff]
  %v39 = vld [vmem:[%s1 + $0x60] sm:$0xff]
  %v40 = vld [vmem:[%s1 + $0x68] sm:$0xff]
  %v41 = vld [vmem:[%s1 + $0x70] sm:$0xff]
  %v42 = vld [vmem:[%s1 + $0x78] sm:$0xff]
  %43 = vmatprep.subr.mxu0 0.0
  %44 = vmatpush1.msra.mxu0 %v27
  %45 = vmatprep.subr.mxu0 0.0
  %46 = vmatpush1.msra.mxu0 %v28
  %47 = vmatprep.subr.mxu0 0.0
  %48 = vmatpush1.msra.mxu0 %v29
  %49 = vmatprep.subr.mxu0 0.0
  %50 = vmatpush1.msra.mxu0 %v30
  %51 = vmatprep.subr.mxu0 0.0
  %52 = vmatpush1.msra.mxu0 %v31
  %53 = vmatprep.subr.mxu0 0.0
  %54 = vmatpush1.msra.mxu0 %v32
  %55 = vmatprep.subr.mxu0 0.0
  %56 = vmatpush1.msra.mxu0 %v33
  %57 = vmatprep.subr.mxu0 0.0
  %58 = vmatpush1.msra.mxu0 %v34
  %59 = vmatprep.subr.mxu0 0.0
  %60 = vmatpush1.msra.mxu0 %v35
  %61 = vmatprep.subr.mxu0 0.0
  %62 = vmatpush1.msra.mxu0 %v36
  %63 = vmatprep.subr.mxu0 0.0
  %64 = vmatpush1.msra.mxu0 %v37
  %65 = vmatprep.subr.mxu0 0.0
  %66 = vmatpush1.msra.mxu0 %v38
  %67 = vmatprep.subr.mxu0 0.0
  %68 = vmatpush1.msra.mxu0 %v39
  %69 = vmatprep.subr.mxu0 0.0
  %70 = vmatpush1.msra.mxu0 %v40
  %71 = vmatprep.subr.mxu0 0.0
  %72 = vmatpush1.msra.mxu0 %v41
  %73 = vmatprep.subr.mxu0 0.0
  %74 = vmatpush1.msra.mxu0 %v42
  %75 = vmatprep.subr.mxu0 0.0
  %76 = vmatpush1.msra.mxu0 0.0
  %77 = vmatprep.subr.mxu0 0.0
  %78 = vmatpush1.msra.mxu0 0.0
  %79 = vmatprep.subr.mxu0 0.0
  %80 = vmatpush1.msra.mxu0 0.0
  %81 = vmatprep.subr.mxu0 0.0
  %82 = vmatpush1.msra.mxu0 0.0
  %83 = vmatprep.subr.mxu0 0.0
  %84 = vmatpush1.msra.mxu0 0.0
  %85 = vmatprep.subr.mxu0 0.0
  %86 = vmatpush1.msra.mxu0 0.0
  %87 = vmatprep.subr.mxu0 0.0
  %88 = vmatpush1.msra.mxu0 0.0
  %89 = vmatprep.subr.mxu0 0.0
  %90 = vmatpush1.msra.mxu0 0.0
  %91 = vmatprep.subr.mxu0 0.0
  %92 = vmatpush1.msra.mxu0 0.0
  %93 = vmatprep.subr.mxu0 0.0
  %94 = vmatpush1.msra.mxu0 0.0
  %95 = vmatprep.subr.mxu0 0.0
  %96 = vmatpush1.msra.mxu0 0.0
  %97 = vmatprep.subr.mxu0 0.0
  %98 = vmatpush1.msra.mxu0 0.0
  %99 = vmatprep.subr.mxu0 0.0
  %100 = vmatpush1.msra.mxu0 0.0
  %101 = vmatprep.subr.mxu0 0.0
  %102 = vmatpush1.msra.mxu0 0.0
  %103 = vmatprep.subr.mxu0 0.0
  %104 = vmatpush1.msra.mxu0 0.0
  %105 = vmatprep.subr.mxu0 0.0
  %106 = vmatpush1.msra.mxu0 0.0
  %107 = vmatprep.mubr.f32.mxu0 0.0
  %108 = vmatmul.mubr.f32.gmra.mrb[0].mxu0 %v26
  %v109 = vpop.f32.mrb[0].mxu0
  %v110 = vadd.f32 0.0, %v109
  %v111 = vpop.f32.mrb[0].mxu0
  %112 = vdwg.mxu0
  %v113 = vadd.f32 %v25, %v110
  %114 = vst [vmem:[#allocation2] sm:$0xff] %v113
  // Predicated region
  $region26: #{_mngraph_device.1} parent=0 // pred_check
    %p115 = pneg %p20
  $region27: #{_mngraph_device.1} parent=0 // pred_check_branch
    %117 = sbr.rel (%p115) target = $region29
  $region28: #{_mngraph_device.1} parent=0 // pred_region
    %v118 = vld [vmem:[%s4] sm:$0xff]
    %v119 = vld [vmem:[%s0] sm:$0xff]
    %v120 = vlaneseq
    %v121 = vshrl.u32 %v120, 7
    %v122 = vsub.s32 0, %v121
    %v123 = vrot.slane %v118, %v122
    %v124 = vmul.f32 %v119, %v123
    %v125 = vlaneseq
    %v126 = vshrl.u32 %v125, 7
    %v127 = vsub.s32 1, %v126
    %v128 = vrot.slane %v118, %v127
    %v129 = vadd.f32 %v124, %v128
    %v130 = vld [vmem:[#allocation2] sm:$0xff]
    %v131 = vld [vmem:[%s3] sm:$0xff]
    %v132 = vld [vmem:[%s3 + $0x8] sm:$0xff]
    %v133 = vld [vmem:[%s3 + $0x10] sm:$0xff]
    %v134 = vld [vmem:[%s3 + $0x18] sm:$0xff]
    %v135 = vld [vmem:[%s3 + $0x20] sm:$0xff]
    %v136 = vld [vmem:[%s3 + $0x28] sm:$0xff]
    %v137 = vld [vmem:[%s3 + $0x30] sm:$0xff]
    %v138 = vld [vmem:[%s3 + $0x38] sm:$0xff]
    %v139 = vld [vmem:[%s3 + $0x40] sm:$0xff]
    %v140 = vld [vmem:[%s3 + $0x48] sm:$0xff]
    %v141 = vld [vmem:[%s3 + $0x50] sm:$0xff]
    %v142 = vld [vmem:[%s3 + $0x58] sm:$0xff]
    %v143 = vld [vmem:[%s3 + $0x60] sm:$0xff]
    %v144 = vld [vmem:[%s3 + $0x68] sm:$0xff]
    %v145 = vld [vmem:[%s3 + $0x70] sm:$0xff]
    %v146 = vld [vmem:[%s3 + $0x78] sm:$0xff]
    %v147 = vlaneseq
    %v148 = vshrl.u32 %v147, 7
    %v149 = vsub.s32 2, %v148
    %v150 = vrot.slane %v118, %v149
    %151 = vmatprep.subr.mxu0 0.0
    %152 = vmatpush1.msra.mxu0 %v131
    %153 = vmatprep.subr.mxu0 0.0
    %154 = vmatpush1.msra.mxu0 %v132
    %155 = vmatprep.subr.mxu0 0.0
    %156 = vmatpush1.msra.mxu0 %v133
    %157 = vmatprep.subr.mxu0 0.0
    %158 = vmatpush1.msra.mxu0 %v134
    %159 = vmatprep.subr.mxu0 0.0
    %160 = vmatpush1.msra.mxu0 %v135
    %161 = vmatprep.subr.mxu0 0.0
    %162 = vmatpush1.msra.mxu0 %v136
    %163 = vmatprep.subr.mxu0 0.0
    %164 = vmatpush1.msra.mxu0 %v137
    %165 = vmatprep.subr.mxu0 0.0
    %166 = vmatpush1.msra.mxu0 %v138
    %167 = vmatprep.subr.mxu0 0.0
    %168 = vmatpush1.msra.mxu0 %v139
    %169 = vmatprep.subr.mxu0 0.0
    %170 = vmatpush1.msra.mxu0 %v140
    %171 = vmatprep.subr.mxu0 0.0
    %172 = vmatpush1.msra.mxu0 %v141
    %173 = vmatprep.subr.mxu0 0.0
    %174 = vmatpush1.msra.mxu0 %v142
    %175 = vmatprep.subr.mxu0 0.0
    %176 = vmatpush1.msra.mxu0 %v143
    %177 = vmatprep.subr.mxu0 0.0
    %178 = vmatpush1.msra.mxu0 %v144
    %179 = vmatprep.subr.mxu0 0.0
    %180 = vmatpush1.msra.mxu0 %v145
    %181 = vmatprep.subr.mxu0 0.0
    %182 = vmatpush1.msra.mxu0 %v146
    %183 = vmatprep.subr.mxu0 0.0
    %184 = vmatpush1.msra.mxu0 0.0
    %185 = vmatprep.subr.mxu0 0.0
    %186 = vmatpush1.msra.mxu0 0.0
    %187 = vmatprep.subr.mxu0 0.0
    %188 = vmatpush1.msra.mxu0 0.0
    %189 = vmatprep.subr.mxu0 0.0
    %190 = vmatpush1.msra.mxu0 0.0
    %191 = vmatprep.subr.mxu0 0.0
    %192 = vmatpush1.msra.mxu0 0.0
    %193 = vmatprep.subr.mxu0 0.0
    %194 = vmatpush1.msra.mxu0 0.0
    %195 = vmatprep.subr.mxu0 0.0
    %196 = vmatpush1.msra.mxu0 0.0
    %197 = vmatprep.subr.mxu0 0.0
    %198 = vmatpush1.msra.mxu0 0.0
    %199 = vmatprep.subr.mxu0 0.0
    %200 = vmatpush1.msra.mxu0 0.0
    %201 = vmatprep.subr.mxu0 0.0
    %202 = vmatpush1.msra.mxu0 0.0
    %203 = vmatprep.subr.mxu0 0.0
    %204 = vmatpush1.msra.mxu0 0.0
    %205 = vmatprep.subr.mxu0 0.0
    %206 = vmatpush1.msra.mxu0 0.0
    %207 = vmatprep.subr.mxu0 0.0
    %208 = vmatpush1.msra.mxu0 0.0
    %209 = vmatprep.subr.mxu0 0.0
    %210 = vmatpush1.msra.mxu0 0.0
    %211 = vmatprep.subr.mxu0 0.0
    %212 = vmatpush1.msra.mxu0 0.0
    %213 = vmatprep.subr.mxu0 0.0
    %214 = vmatpush1.msra.mxu0 0.0
    %215 = vmatprep.mubr.f32.mxu0 0.0
    %216 = vmatmul.mubr.f32.gmra.mrb[0].mxu0 %v130
    %v217 = vpop.f32.mrb[0].mxu0
    %v218 = vadd.f32 %v150, %v217
    %v219 = vpop.f32.mrb[0].mxu0
    %220 = vdwg.mxu0
    %v221 = vadd.f32 %v129, %v218
    %v222 = vmax.f32 %v221, 0.0
    %223 = vst [vmem:[%s5] sm:$0xff] %v222
  $region29: #{_mngraph_device.1} parent=0 // pred_fallthru
    _
  // Predicated region
  $region30: #{_mngraph_device.1} parent=0 // pred_check
    _
  $region31: #{_mngraph_device.1} parent=0 // pred_check_branch
    %225 = sbr.rel (0) target = $region33
  $region32: #{_mngraph_device.1} parent=0 // pred_region
    _
  $region33: #{_mngraph_device.1} parent=0 // pred_fallthru
    _
  // Predicated region
  $region34: #{_mngraph_device.1} parent=0 // pred_check
    _
  $region35: #{_mngraph_device.1} parent=0 // pred_check_branch
    %227 = sbr.rel (0) target = $region37
  $region36: #{_mngraph_device.1} parent=0 // pred_region
    _
  $region37: #{_mngraph_device.1} parent=0 // pred_fallthru
    _

</llo_original>
